<compile_context>
chip_gen: v5e
topology: v5e:2x2
jax: 0.10.0
libtpu: 0.0.40
codegen_flags: <defaults>
</compile_context>

<pallas_src>
import functools

import jax
import jax.numpy as jnp
from jax.experimental import pallas as pl
from jax.experimental.pallas import tpu as pltpu


def _set_embedding_kernel(idx_ref, table_ref, w1t_ref, w2t_ref, out_ref,
                          *, set_rows, valid_rows):
    """One grid step: TB batch rows flattened to n = TB * set_rows item rows.

    idx_ref   : (n, 1) int32  token ids (padded positions hold id 0)
    table_ref : (V, D)        embedding table, resident in VMEM
    w1t_ref   : (D, D)        fc1 weight, already (in, out)
    w2t_ref   : (D, D)        fc2 weight, already (in, out)
    out_ref   : (n, D)        sigmoid(fc1(e) + fc2(amax_set(e)))
    """
    n, d = out_ref.shape
    v = table_ref.shape[0]
    tb = n // set_rows  # batch rows in this block (static)

    # ---- Embedding gather, fused in-kernel: one-hot @ table on the MXU. ------
    ids = idx_ref[...]                                            # (n, 1)
    vocab = jax.lax.broadcasted_iota(jnp.int32, (n, v), 1)        # (n, V)
    onehot = (vocab == ids).astype(table_ref.dtype)               # (n, V)
    # HIGHEST => exact fp32 row selection (matches nn.Embedding / jnp.take).
    e = jnp.dot(onehot, table_ref[...],
                preferred_element_type=jnp.float32,
                precision=jax.lax.Precision.HIGHEST)              # (n, D)

    # ---- Per-set amax, gathered into one (TB, D) matrix so fc2 is a single
    # ---- batched matmul (no 1-row MXU passes). Padded set rows are excluded.
    maxes = [
        jnp.max(e[b * set_rows: b * set_rows + valid_rows, :], axis=0,
                keepdims=True)
        for b in range(tb)
    ]
    maxp = jnp.concatenate(maxes, axis=0) if tb > 1 else maxes[0]  # (TB, D)

    # ---- Two batched MXU matmuls: M = TB*S for fc1, M = TB for fc2. ----------
    h1 = jnp.dot(e, w1t_ref[...], preferred_element_type=jnp.float32)     # (n, D)
    h2 = jnp.dot(maxp, w2t_ref[...], preferred_element_type=jnp.float32)  # (TB, D)

    # ---- Broadcast fc2(maxp) over each set, sigmoid in f32, store. -----------
    for b in range(tb):
        rows = slice(b * set_rows, (b + 1) * set_rows)
        combo = h1[rows, :] + h2[b:b + 1, :]                      # (set_rows, D)
        out_ref[rows, :] = jax.nn.sigmoid(combo).astype(out_ref.dtype)


def set_embedding_forward(idx, emb_table, w1, w2, *, block_b=None):
    """Fused SetEmbedding forward.

    idx:       (B, S) integer token ids
    emb_table: (V, D) nn.Embedding weight
    w1, w2:    (D, D) nn.Linear weights in PyTorch (out, in) layout
    returns    (B, S, D) = sigmoid(fc1(emb) + fc2(amax_S(emb)))
    """
    B, S = idx.shape
    V, D = emb_table.shape
    if D % 128 != 0:
        raise ValueError("embedding_dim must be a multiple of 128 (TPU lane width)")

    # PyTorch stores (out, in); kernel computes x @ W_t with W_t = (in, out).
    # Under jit this folds into the parameter constants (done once, not per step).
    w1t = jnp.asarray(w1).T
    w2t = jnp.asarray(w2).T

    # Pad the set axis to a sublane multiple so every per-set row block is
    # (8k, 128) aligned; padded positions are masked out of the max and sliced
    # off the output.
    S_pad = -(-S // 8) * 8

    # Rows of the flattened (TB*S_pad, D) matmul per grid step: enough to fill
    # the MXU (>=256 rows when B allows it) and amortize the ~0.35us/step
    # overhead, while staying far under v7x's 64 MiB VMEM even double-buffered.
    if block_b is None:
        block_b = max(1, 1024 // S_pad)
    if block_b >= B:
        block_b, grid_b = B, 1                    # whole batch in one step
    else:
        block_b = max(8, (block_b // 8) * 8)      # sublane-aligned idx/out blocks
        grid_b = pl.cdiv(B, block_b)
    B_pad = grid_b * block_b

    idx = jnp.asarray(idx, jnp.int32)
    if (B_pad, S_pad) != (B, S):
        # Padded ids point at row 0 (valid); padded outputs are sliced away.
        idx = jnp.pad(idx, ((0, B_pad - B), (0, S_pad - S)))
    idx_col = idx.reshape(B_pad * S_pad, 1)

    n_block = block_b * S_pad
    kernel = functools.partial(_set_embedding_kernel,
                               set_rows=S_pad, valid_rows=S)

    out_flat = pl.pallas_call(
        kernel,
        out_shape=jax.ShapeDtypeStruct((B_pad * S_pad, D), emb_table.dtype),
        grid=(grid_b,),
        in_specs=[
            pl.BlockSpec((n_block, 1), lambda b: (b, 0)),   # token ids for this block
            # TODO(synk): for large vocabularies keep the table in HBM
            # (memory_space=pl.ANY) and DMA-gather rows instead of holding the
            # whole (V, D) table resident in VMEM.
            pl.BlockSpec((V, D), lambda b: (0, 0)),          # embedding table (resident)
            pl.BlockSpec((D, D), lambda b: (0, 0)),          # fc1^T (resident)
            pl.BlockSpec((D, D), lambda b: (0, 0)),          # fc2^T (resident)
        ],
        out_specs=pl.BlockSpec((n_block, D), lambda b: (b, 0)),
        compiler_params=pltpu.CompilerParams(
            dimension_semantics=("parallel",),               # lets v7x split batch over 2 TCs
        ),
    )(idx_col, emb_table, w1t, w2t)

    out = out_flat.reshape(B_pad, S_pad, D)
    if (B_pad, S_pad) != (B, S):
        out = out[:B, :S]
    return out


def _reference(idx, emb_table, w1, w2):
    e = jnp.take(emb_table, idx, axis=0)
    maxp = jnp.max(e, axis=1, keepdims=True)
    combo = e @ w1.T + maxp @ w2.T
    return jax.nn.sigmoid(combo)


if __name__ == "__main__":
    num_embeddings = 32
    embedding_dim = 128
    B, S = 2, 8

    key = jax.random.PRNGKey(0)
    k_emb, k_w1, k_w2, k_idx = jax.random.split(key, 4)

    # nn.Embedding init: N(0, 1); nn.Linear(no bias) init: uniform(-1/sqrt(D), 1/sqrt(D)).
    emb_table = jax.random.normal(k_emb, (num_embeddings, embedding_dim), jnp.float32)
    bound = 1.0 / (embedding_dim ** 0.5)
    w1 = jax.random.uniform(k_w1, (embedding_dim, embedding_dim), jnp.float32,
                            minval=-bound, maxval=bound)
    w2 = jax.random.uniform(k_w2, (embedding_dim, embedding_dim), jnp.float32,
                            minval=-bound, maxval=bound)
    idx = jax.random.randint(k_idx, (B, S), 0, num_embeddings, dtype=jnp.int32)

    fwd = jax.jit(set_embedding_forward)
    out = jax.block_until_ready(fwd(idx, emb_table, w1, w2))

    ref = _reference(idx, emb_table, w1, w2)
    assert out.shape == (B, S, embedding_dim)
    assert jnp.allclose(out, ref, atol=1e-5, rtol=1e-5), \
        float(jnp.max(jnp.abs(out - ref)))

    print("KERNEL_OK")
</pallas_src>

<mosaic_0001>
module attributes {stable_mosaic.version = 11 : i64} {
  func.func @_set_embedding_kernel(%arg0: i32, %arg1: memref<16x1xi32, #tpu.memory_space<vmem>>, %arg2: memref<32x128xf32, #tpu.memory_space<vmem>>, %arg3: memref<128x128xf32, #tpu.memory_space<vmem>>, %arg4: memref<128x128xf32, #tpu.memory_space<vmem>>, %arg5: memref<16x128xf32, #tpu.memory_space<vmem>>) attributes {dimension_semantics = [#tpu.dimension_semantics<parallel>], iteration_bounds = array<i64: 1>, scalar_prefetch = 0 : i64, scratch_operands = 0 : i64, tpu.core_type = #tpu.core_type<tc>, window_params = [{transform_indices = @transform_0, window_bounds = array<i64: 16, 1>}, {pipeline_mode = #tpu.pipeline_mode<synchronous>, transform_indices = @transform_1, window_bounds = array<i64: 32, 128>}, {pipeline_mode = #tpu.pipeline_mode<synchronous>, transform_indices = @transform_2, window_bounds = array<i64: 128, 128>}, {pipeline_mode = #tpu.pipeline_mode<synchronous>, transform_indices = @transform_3, window_bounds = array<i64: 128, 128>}, {transform_indices = @transform_4, window_bounds = array<i64: 16, 128>}]} {
    %c0 = arith.constant 0 : index
    %c0_0 = arith.constant 0 : index
    %0 = vector.load %arg1[%c0, %c0_0] : memref<16x1xi32, #tpu.memory_space<vmem>>, vector<16x1xi32>
    %1 = tpu.iota {dimensions = array<i32: 1>} : vector<16x32xi32>
    %2 = vector.broadcast %0 : vector<16x1xi32> to vector<16x32xi32>
    %3 = arith.cmpi eq, %1, %2 : vector<16x32xi32>
    %4 = arith.extui %3 : vector<16x32xi1> to vector<16x32xi32>
    %5 = arith.sitofp %4 : vector<16x32xi32> to vector<16x32xf32>
    %c0_1 = arith.constant 0 : index
    %c0_2 = arith.constant 0 : index
    %6 = vector.load %arg2[%c0_1, %c0_2] : memref<32x128xf32, #tpu.memory_space<vmem>>, vector<32x128xf32>
    %cst = arith.constant dense<0.000000e+00> : vector<16x128xf32>
    %7 = tpu.matmul %5, %6, %cst {dimension_numbers = #tpu.dot_dimension_numbers<[1], [0], [0], [1], [0, 0, 1, 1], [], []>, precision = #tpu.contract_precision<fp32>} : vector<16x32xf32>, vector<32x128xf32>, vector<16x128xf32> -> vector<16x128xf32>
    %8 = vector.extract_strided_slice %7 {offsets = [0, 0], sizes = [8, 128], strides = [1, 1]} : vector<16x128xf32> to vector<8x128xf32>
    %cst_3 = arith.constant dense<0xFF800000> : vector<128xf32>
    %9 = vector.multi_reduction <maximumf>, %8, %cst_3 [0] : vector<8x128xf32> to vector<128xf32>
    %10 = vector.shape_cast %9 : vector<128xf32> to vector<1x128xf32>
    %11 = vector.extract_strided_slice %7 {offsets = [8, 0], sizes = [8, 128], strides = [1, 1]} : vector<16x128xf32> to vector<8x128xf32>
    %cst_4 = arith.constant dense<0xFF800000> : vector<128xf32>
    %12 = vector.multi_reduction <maximumf>, %11, %cst_4 [0] : vector<8x128xf32> to vector<128xf32>
    %13 = vector.shape_cast %12 : vector<128xf32> to vector<1x128xf32>
    %14 = tpu.concatenate %10, %13 in 0 : vector<1x128xf32>, vector<1x128xf32> -> vector<2x128xf32>
    %c0_5 = arith.constant 0 : index
    %c0_6 = arith.constant 0 : index
    %15 = vector.load %arg3[%c0_5, %c0_6] : memref<128x128xf32, #tpu.memory_space<vmem>>, vector<128x128xf32>
    %cst_7 = arith.constant dense<0.000000e+00> : vector<16x128xf32>
    %16 = tpu.matmul %7, %15, %cst_7 {dimension_numbers = #tpu.dot_dimension_numbers<[1], [0], [0], [1], [0, 0, 1, 1], [], []>} : vector<16x128xf32>, vector<128x128xf32>, vector<16x128xf32> -> vector<16x128xf32>
    %c0_8 = arith.constant 0 : index
    %c0_9 = arith.constant 0 : index
    %17 = vector.load %arg4[%c0_8, %c0_9] : memref<128x128xf32, #tpu.memory_space<vmem>>, vector<128x128xf32>
    %cst_10 = arith.constant dense<0.000000e+00> : vector<2x128xf32>
    %18 = tpu.matmul %14, %17, %cst_10 {dimension_numbers = #tpu.dot_dimension_numbers<[1], [0], [0], [1], [0, 0, 1, 1], [], []>} : vector<2x128xf32>, vector<128x128xf32>, vector<2x128xf32> -> vector<2x128xf32>
    %19 = vector.extract_strided_slice %16 {offsets = [0, 0], sizes = [8, 128], strides = [1, 1]} : vector<16x128xf32> to vector<8x128xf32>
    %20 = vector.extract_strided_slice %18 {offsets = [0, 0], sizes = [1, 128], strides = [1, 1]} : vector<2x128xf32> to vector<1x128xf32>
    %21 = vector.broadcast %20 : vector<1x128xf32> to vector<8x128xf32>
    %22 = arith.addf %19, %21 : vector<8x128xf32>
    %23 = arith.negf %22 : vector<8x128xf32>
    %24 = math.exp %23 : vector<8x128xf32>
    %cst_11 = arith.constant 1.000000e+00 : f32
    %25 = vector.broadcast %cst_11 : f32 to vector<8x128xf32>
    %26 = arith.addf %25, %24 : vector<8x128xf32>
    %27 = arith.divf %25, %26 : vector<8x128xf32>
    %c0_12 = arith.constant 0 : index
    %c0_13 = arith.constant 0 : index
    %28 = vector.load %arg5[%c0_12, %c0_13] : memref<16x128xf32, #tpu.memory_space<vmem>>, vector<8x128xf32>
    tpu.vector_store %arg5[%c0_12, %c0_13], %27 {strides = array<i32>} : memref<16x128xf32, #tpu.memory_space<vmem>>, vector<8x128xf32>,
    %29 = vector.extract_strided_slice %16 {offsets = [8, 0], sizes = [8, 128], strides = [1, 1]} : vector<16x128xf32> to vector<8x128xf32>
    %30 = vector.extract_strided_slice %18 {offsets = [1, 0], sizes = [1, 128], strides = [1, 1]} : vector<2x128xf32> to vector<1x128xf32>
    %31 = vector.broadcast %30 : vector<1x128xf32> to vector<8x128xf32>
    %32 = arith.addf %29, %31 : vector<8x128xf32>
    %33 = arith.negf %32 : vector<8x128xf32>
    %34 = math.exp %33 : vector<8x128xf32>
    %cst_14 = arith.constant 1.000000e+00 : f32
    %35 = vector.broadcast %cst_14 : f32 to vector<8x128xf32>
    %36 = arith.addf %35, %34 : vector<8x128xf32>
    %37 = arith.divf %35, %36 : vector<8x128xf32>
    %c8 = arith.constant 8 : index
    %c0_15 = arith.constant 0 : index
    %38 = vector.load %arg5[%c8, %c0_15] : memref<16x128xf32, #tpu.memory_space<vmem>>, vector<8x128xf32>
    tpu.vector_store %arg5[%c8, %c0_15], %37 {strides = array<i32>} : memref<16x128xf32, #tpu.memory_space<vmem>>, vector<8x128xf32>,
    return
  }
  func.func @transform_0(%arg0: i32) -> (i32, i32) {
    %c0_i32 = arith.constant 0 : i32
    %c0_i32_0 = arith.constant 0 : i32
    return %arg0, %c0_i32 : i32, i32
  }
  func.func @transform_1(%arg0: i32) -> (i32, i32) {
    %c0_i32 = arith.constant 0 : i32
    %c0_i32_0 = arith.constant 0 : i32
    %c0_i32_1 = arith.constant 0 : i32
    return %c0_i32, %c0_i32_0 : i32, i32
  }
  func.func @transform_2(%arg0: i32) -> (i32, i32) {
    %c0_i32 = arith.constant 0 : i32
    %c0_i32_0 = arith.constant 0 : i32
    %c0_i32_1 = arith.constant 0 : i32
    return %c0_i32, %c0_i32_0 : i32, i32
  }
  func.func @transform_3(%arg0: i32) -> (i32, i32) {
    %c0_i32 = arith.constant 0 : i32
    %c0_i32_0 = arith.constant 0 : i32
    %c0_i32_1 = arith.constant 0 : i32
    return %c0_i32, %c0_i32_0 : i32, i32
  }
  func.func @transform_4(%arg0: i32) -> (i32, i32) {
    %c0_i32 = arith.constant 0 : i32
    %c0_i32_0 = arith.constant 0 : i32
    return %arg0, %c0_i32 : i32, i32
  }
}

</mosaic_0001>

<llo_original>
// kernel: set_embedding_forward.1
$region0: #{set_embedding_forward.1}
  #allocation0 [shape = 'u32[]', space=smem, size = 0x4, offset = 0x4, fixed_abs, tag = 'smem constant byte address 0x4 - core index']
  #allocation1 [shape = 'u32[72,128]{1,0:T(1,128)}', space=vmem, size = 0x9000, scoped, tag = 'internal scratch']
  %s0 = inlined_call_operand.vmem [shape: s32[16,1], index: 0, kind: input, shape index: {}]
  %s1 = inlined_call_operand.vmem [shape: f32[32,128], index: 1, kind: input, shape index: {}]
  %s2 = inlined_call_operand.vmem [shape: f32[128,128], index: 2, kind: input, shape index: {}]
  %s3 = inlined_call_operand.vmem [shape: f32[128,128], index: 3, kind: input, shape index: {}]
  %s4 = inlined_call_operand.hbm [shape: f32[16,128], index: 4, kind: output, shape index: {}]
  %s5 = sld [smem:[#allocation0]]
  $region26: #{set_embedding_forward.1} parent=0
    _
  %s7 = ssub.s32 1, %s5
  %s8 = scalar_select 0, %s7, %s5
  $region1: #{set_embedding_forward.1} parent=0
    #allocation2 [shape = 'u8[8192]{0}', space=vmem, size = 0x2000, scoped, tag = 'output window, operand 0, single buffered']
    #allocation3 [shape = 's32[1]{0}', space=sflag, size = 0x4, scoped, tag = 'scoped memory for set_embedding_forward.1']
    %9 = vsyncpa [#allocation3], 0
    // Predicated region
    $region2: #{set_embedding_forward.1} parent=1 // pred_check
      _
    $region3: #{set_embedding_forward.1} parent=1 // pred_check_branch
      %11 = sbr.rel (0) target = $region5
    $region4: #{set_embedding_forward.1} parent=1 // pred_region
      _
    $region5: #{set_embedding_forward.1} parent=1 // pred_fallthru
      _
    // Predicated region
    $region6: #{set_embedding_forward.1} parent=1 // pred_check
      _
    $region7: #{set_embedding_forward.1} parent=1 // pred_check_branch
      %13 = sbr.rel (0) target = $region9
    $region8: #{set_embedding_forward.1} parent=1 // pred_region
      _
    $region9: #{set_embedding_forward.1} parent=1 // pred_fallthru
      _
    // Predicated region
    $region10: #{set_embedding_forward.1} parent=1 // pred_check
      _
    $region11: #{set_embedding_forward.1} parent=1 // pred_check_branch
      %15 = sbr.rel (0) target = $region13
    $region12: #{set_embedding_forward.1} parent=1 // pred_region
      _
    $region13: #{set_embedding_forward.1} parent=1 // pred_fallthru
      _
    // Predicated region
    $region14: #{set_embedding_forward.1} parent=1 // pred_check
      _
    $region15: #{set_embedding_forward.1} parent=1 // pred_check_branch
      %17 = sbr.rel (0) target = $region17
    $region16: #{set_embedding_forward.1} parent=1 // pred_region
      _
    $region17: #{set_embedding_forward.1} parent=1 // pred_fallthru
      _
    %v18 = vld [vmem:[%s0] sm:$0xff]
    %v19 = vld [vmem:[%s0 + $0x8] sm:$0xff]
    %v20 = vlaneseq
    %v21 = vand.u32 %v20, 127
    %22 = vset.pattern.permute.xlu0 0
    %23 = vperm.xlu0 %22, %v18
    %v24 = vpop.permute.xlu0 %23
    %25 = vset.pattern.permute.xlu0 0
    %26 = vperm.xlu0 %25, %v19
    %v27 = vpop.permute.xlu0 %26
    %vm28 = vcmp.eq.s32.totalorder %v21, %v24
    %vm29 = vcmp.eq.s32.totalorder %v21, %v27
    %v30 = vsel %vm28, 1, 0
    %v31 = vsel %vm29, 1, 0
    %v32 = vcvt.s32.f32 %v30
    %v33 = vcvt.s32.f32 %v31
    %v34 = vld [vmem:[%s1] sm:$0xff]
    %v35 = vld [vmem:[%s1 + $0x8] sm:$0xff]
    %v36 = vld [vmem:[%s1 + $0x10] sm:$0xff]
    %v37 = vld [vmem:[%s1 + $0x18] sm:$0xff]
    %vm38 = vcmask 261120
    %v40 = vsel %vm38, %v32, 0
    %v43 = vsel %vm38, %v33, 0
    %45 = vmatpush.msra.mxu0 0.0
    %46 = vmatpush.msra.mxu0 0.0
    %47 = vmatpush.msra.mxu0 0.0
    %48 = vmatpush.msra.mxu0 0.0
    %49 = vmatpush.msra.mxu0 0.0
    %50 = vmatpush.msra.mxu0 0.0
    %51 = vmatpush.msra.mxu0 0.0
    %52 = vmatpush.msra.mxu0 0.0
    %53 = vmatpush.msra.mxu0 0.0
    %54 = vmatpush.msra.mxu0 0.0
    %55 = vmatpush.msra.mxu0 0.0
    %56 = vmatpush.msra.mxu0 0.0
    %v57 = vand.u32 %v37, 4294901760
    %58 = vmatpush.msra.mxu0 %v57
    %v59 = vand.u32 %v36, 4294901760
    %60 = vmatpush.msra.mxu0 %v59
    %v61 = vand.u32 %v35, 4294901760
    %62 = vmatpush.msra.mxu0 %v61
    %v63 = vand.u32 %v34, 4294901760
    %64 = vmatpush.msra.mxu0 %v63
    %v65 = vand.u32 %v40, 4294901760
    %v66 = vsub.f32 %v40, %v65
    %v67 = vand.u32 %v66, 4294901760
    %v68 = vsub.f32 %v66, %v67
    %v69 = vand.u32 %v68, 4294901760
    %70 = vmatmul.f32.gmra.mxu0 %v69
    %v71 = vpop.f32.mrf.mxu0
    %v72 = vadd.f32 0.0, %v71
    %v73 = vand.u32 %v43, 4294901760
    %v74 = vsub.f32 %v43, %v73
    %v75 = vand.u32 %v74, 4294901760
    %v76 = vsub.f32 %v74, %v75
    %v77 = vand.u32 %v76, 4294901760
    %78 = vmatmul.f32.gmra.mxu0 %v77
    %v79 = vpop.f32.mrf.mxu0
    %v80 = vadd.f32 0.0, %v79
    %81 = vdwg.mxu0
    %82 = vmatpush.msra.mxu0 0.0
    %83 = vmatpush.msra.mxu0 0.0
    %84 = vmatpush.msra.mxu0 0.0
    %85 = vmatpush.msra.mxu0 0.0
    %86 = vmatpush.msra.mxu0 0.0
    %87 = vmatpush.msra.mxu0 0.0
    %88 = vmatpush.msra.mxu0 0.0
    %89 = vmatpush.msra.mxu0 0.0
    %90 = vmatpush.msra.mxu0 0.0
    %91 = vmatpush.msra.mxu0 0.0
    %92 = vmatpush.msra.mxu0 0.0
    %93 = vmatpush.msra.mxu0 0.0
    %v94 = vand.u32 %v37, 4294901760
    %v95 = vsub.f32 %v37, %v94
    %v96 = vand.u32 %v95, 4294901760
    %v97 = vsub.f32 %v95, %v96
    %v98 = vand.u32 %v97, 4294901760
    %99 = vmatpush.msra.mxu0 %v98
    %v100 = vand.u32 %v36, 4294901760
    %v101 = vsub.f32 %v36, %v100
    %v102 = vand.u32 %v101, 4294901760
    %v103 = vsub.f32 %v101, %v102
    %v104 = vand.u32 %v103, 4294901760
    %105 = vmatpush.msra.mxu0 %v104
    %v106 = vand.u32 %v35, 4294901760
    %v107 = vsub.f32 %v35, %v106
    %v108 = vand.u32 %v107, 4294901760
    %v109 = vsub.f32 %v107, %v108
    %v110 = vand.u32 %v109, 4294901760
    %111 = vmatpush.msra.mxu0 %v110
    %v112 = vand.u32 %v34, 4294901760
    %v113 = vsub.f32 %v34, %v112
    %v114 = vand.u32 %v113, 4294901760
    %v115 = vsub.f32 %v113, %v114
    %v116 = vand.u32 %v115, 4294901760
    %117 = vmatpush.msra.mxu0 %v116
    %v118 = vand.u32 %v40, 4294901760
    %119 = vmatmul.f32.gmra.mxu0 %v118
    %v120 = vpop.f32.mrf.mxu0
    %v121 = vadd.f32 %v72, %v120
    %v122 = vand.u32 %v43, 4294901760
    %123 = vmatmul.f32.gmra.mxu0 %v122
    %v124 = vpop.f32.mrf.mxu0
    %v125 = vadd.f32 %v80, %v124
    %126 = vdwg.mxu0
    %127 = vmatpush.msra.mxu0 0.0
    %128 = vmatpush.msra.mxu0 0.0
    %129 = vmatpush.msra.mxu0 0.0
    %130 = vmatpush.msra.mxu0 0.0
    %131 = vmatpush.msra.mxu0 0.0
    %132 = vmatpush.msra.mxu0 0.0
    %133 = vmatpush.msra.mxu0 0.0
    %134 = vmatpush.msra.mxu0 0.0
    %135 = vmatpush.msra.mxu0 0.0
    %136 = vmatpush.msra.mxu0 0.0
    %137 = vmatpush.msra.mxu0 0.0
    %138 = vmatpush.msra.mxu0 0.0
    %v139 = vand.u32 %v37, 4294901760
    %v140 = vsub.f32 %v37, %v139
    %141 = vmatpush.msra.mxu0 %v140
    %v142 = vand.u32 %v36, 4294901760
    %v143 = vsub.f32 %v36, %v142
    %144 = vmatpush.msra.mxu0 %v143
    %v145 = vand.u32 %v35, 4294901760
    %v146 = vsub.f32 %v35, %v145
    %147 = vmatpush.msra.mxu0 %v146
    %v148 = vand.u32 %v34, 4294901760
    %v149 = vsub.f32 %v34, %v148
    %150 = vmatpush.msra.mxu0 %v149
    %v151 = vand.u32 %v40, 4294901760
    %v152 = vsub.f32 %v40, %v151
    %153 = vmatmul.f32.gmra.mxu0 %v152
    %v154 = vpop.f32.mrf.mxu0
    %v155 = vadd.f32 %v121, %v154
    %v156 = vand.u32 %v43, 4294901760
    %v157 = vsub.f32 %v43, %v156
    %158 = vmatmul.f32.gmra.mxu0 %v157
    %v159 = vpop.f32.mrf.mxu0
    %v160 = vadd.f32 %v125, %v159
    %161 = vdwg.mxu0
    %162 = vmatpush.msra.mxu0 0.0
    %163 = vmatpush.msra.mxu0 0.0
    %164 = vmatpush.msra.mxu0 0.0
    %165 = vmatpush.msra.mxu0 0.0
    %166 = vmatpush.msra.mxu0 0.0
    %167 = vmatpush.msra.mxu0 0.0
    %168 = vmatpush.msra.mxu0 0.0
    %169 = vmatpush.msra.mxu0 0.0
    %170 = vmatpush.msra.mxu0 0.0
    %171 = vmatpush.msra.mxu0 0.0
    %172 = vmatpush.msra.mxu0 0.0
    %173 = vmatpush.msra.mxu0 0.0
    %v174 = vand.u32 %v37, 4294901760
    %175 = vmatpush.msra.mxu0 %v174
    %v176 = vand.u32 %v36, 4294901760
    %177 = vmatpush.msra.mxu0 %v176
    %v178 = vand.u32 %v35, 4294901760
    %179 = vmatpush.msra.mxu0 %v178
    %v180 = vand.u32 %v34, 4294901760
    %181 = vmatpush.msra.mxu0 %v180
    %v182 = vand.u32 %v40, 4294901760
    %v183 = vsub.f32 %v40, %v182
    %v184 = vand.u32 %v183, 4294901760
    %185 = vmatmul.f32.gmra.mxu0 %v184
    %v186 = vpop.f32.mrf.mxu0
    %v187 = vadd.f32 %v155, %v186
    %v188 = vand.u32 %v43, 4294901760
    %v189 = vsub.f32 %v43, %v188
    %v190 = vand.u32 %v189, 4294901760
    %191 = vmatmul.f32.gmra.mxu0 %v190
    %v192 = vpop.f32.mrf.mxu0
    %v193 = vadd.f32 %v160, %v192
    %194 = vdwg.mxu0
    %195 = vmatpush.msra.mxu0 0.0
    %196 = vmatpush.msra.mxu0 0.0
    %197 = vmatpush.msra.mxu0 0.0
    %198 = vmatpush.msra.mxu0 0.0
    %199 = vmatpush.msra.mxu0 0.0
    %200 = vmatpush.msra.mxu0 0.0
    %201 = vmatpush.msra.mxu0 0.0
    %202 = vmatpush.msra.mxu0 0.0
    %203 = vmatpush.msra.mxu0 0.0
    %204 = vmatpush.msra.mxu0 0.0
    %205 = vmatpush.msra.mxu0 0.0
    %206 = vmatpush.msra.mxu0 0.0
    %v207 = vand.u32 %v37, 4294901760
    %v208 = vsub.f32 %v37, %v207
    %v209 = vand.u32 %v208, 4294901760
    %210 = vmatpush.msra.mxu0 %v209
    %v211 = vand.u32 %v36, 4294901760
    %v212 = vsub.f32 %v36, %v211
    %v213 = vand.u32 %v212, 4294901760
    %214 = vmatpush.msra.mxu0 %v213
    %v215 = vand.u32 %v35, 4294901760
    %v216 = vsub.f32 %v35, %v215
    %v217 = vand.u32 %v216, 4294901760
    %218 = vmatpush.msra.mxu0 %v217
    %v219 = vand.u32 %v34, 4294901760
    %v220 = vsub.f32 %v34, %v219
    %v221 = vand.u32 %v220, 4294901760
    %222 = vmatpush.msra.mxu0 %v221
    %v223 = vand.u32 %v40, 4294901760
    %224 = vmatmul.f32.gmra.mxu0 %v223
    %v225 = vpop.f32.mrf.mxu0
    %v226 = vadd.f32 %v187, %v225
    %v227 = vand.u32 %v43, 4294901760
    %228 = vmatmul.f32.gmra.mxu0 %v227
    %v229 = vpop.f32.mrf.mxu0
    %v230 = vadd.f32 %v193, %v229
    %231 = vdwg.mxu0
    %232 = vmatpush.msra.mxu0 0.0
    %233 = vmatpush.msra.mxu0 0.0
    %234 = vmatpush.msra.mxu0 0.0
    %235 = vmatpush.msra.mxu0 0.0
    %236 = vmatpush.msra.mxu0 0.0
    %237 = vmatpush.msra.mxu0 0.0
    %238 = vmatpush.msra.mxu0 0.0
    %239 = vmatpush.msra.mxu0 0.0
    %240 = vmatpush.msra.mxu0 0.0
    %241 = vmatpush.msra.mxu0 0.0
    %242 = vmatpush.msra.mxu0 0.0
    %243 = vmatpush.msra.mxu0 0.0
    %v244 = vand.u32 %v37, 4294901760
    %245 = vmatpush.msra.mxu0 %v244
    %v246 = vand.u32 %v36, 4294901760
    %247 = vmatpush.msra.mxu0 %v246
    %v248 = vand.u32 %v35, 4294901760
    %249 = vmatpush.msra.mxu0 %v248
    %v250 = vand.u32 %v34, 4294901760
    %251 = vmatpush.msra.mxu0 %v250
    %v252 = vand.u32 %v40, 4294901760
    %253 = vmatmul.f32.gmra.mxu0 %v252
    %v254 = vpop.f32.mrf.mxu0
    %v255 = vadd.f32 %v226, %v254
    %v256 = vand.u32 %v43, 4294901760
    %257 = vmatmul.f32.gmra.mxu0 %v256
    %v258 = vpop.f32.mrf.mxu0
    %v259 = vadd.f32 %v230, %v258
    %260 = vdwg.mxu0
    %v261 = vrot.slane %v255, 4
    %v262 = vmax.f32 %v255, %v261
    %v263 = vrot.slane %v262, 2
    %v264 = vmax.f32 %v262, %v263
    %v265 = vrot.slane %v264, 1
    %v266 = vmax.f32 %v264, %v265
    %v267 = vrot.slane %v259, 4
    %v268 = vmax.f32 %v259, %v267
    %v269 = vrot.slane %v268, 2
    %v270 = vmax.f32 %v268, %v269
    %v271 = vrot.slane %v270, 1
    %v272 = vmax.f32 %v270, %v271
    %vm273 = vcmask 1040384
    %v274 = vsel %vm273, %v266, %v272
    %v275 = vld [vmem:[%s2] sm:$0xff]
    %v276 = vld [vmem:[%s2 + $0x8] sm:$0xff]
    %v277 = vld [vmem:[%s2 + $0x10] sm:$0xff]
    %v278 = vld [vmem:[%s2 + $0x18] sm:$0xff]
    %v279 = vld [vmem:[%s2 + $0x20] sm:$0xff]
    %v280 = vld [vmem:[%s2 + $0x28] sm:$0xff]
    %v281 = vld [vmem:[%s2 + $0x30] sm:$0xff]
    %v282 = vld [vmem:[%s2 + $0x38] sm:$0xff]
    %v283 = vld [vmem:[%s2 + $0x40] sm:$0xff]
    %v284 = vld [vmem:[%s2 + $0x48] sm:$0xff]
    %v285 = vld [vmem:[%s2 + $0x50] sm:$0xff]
    %v286 = vld [vmem:[%s2 + $0x58] sm:$0xff]
    %v287 = vld [vmem:[%s2 + $0x60] sm:$0xff]
    %v288 = vld [vmem:[%s2 + $0x68] sm:$0xff]
    %v289 = vld [vmem:[%s2 + $0x70] sm:$0xff]
    %v290 = vld [vmem:[%s2 + $0x78] sm:$0xff]
    %291 = vmatpush.msra.mxu0 %v290
    %292 = vmatpush.msra.mxu0 %v289
    %293 = vmatpush.msra.mxu0 %v288
    %294 = vmatpush.msra.mxu0 %v287
    %295 = vmatpush.msra.mxu0 %v286
    %296 = vmatpush.msra.mxu0 %v285
    %297 = vmatpush.msra.mxu0 %v284
    %298 = vmatpush.msra.mxu0 %v283
    %299 = vmatpush.msra.mxu0 %v282
    %300 = vmatpush.msra.mxu0 %v281
    %301 = vmatpush.msra.mxu0 %v280
    %302 = vmatpush.msra.mxu0 %v279
    %303 = vmatpush.msra.mxu0 %v278
    %304 = vmatpush.msra.mxu0 %v277
    %305 = vmatpush.msra.mxu0 %v276
    %306 = vmatpush.msra.mxu0 %v275
    %307 = vmatmul.f32.gmra.mxu0 %v255
    %v308 = vpop.f32.mrf.mxu0
    %v309 = vadd.f32 0.0, %v308
    %310 = vmatmul.f32.gmra.mxu0 %v259
    %v311 = vpop.f32.mrf.mxu0
    %v312 = vadd.f32 0.0, %v311
    %313 = vdwg.mxu0
    %v314 = vld [vmem:[%s3] sm:$0xff]
    %v315 = vld [vmem:[%s3 + $0x8] sm:$0xff]
    %v316 = vld [vmem:[%s3 + $0x10] sm:$0xff]
    %v317 = vld [vmem:[%s3 + $0x18] sm:$0xff]
    %v318 = vld [vmem:[%s3 + $0x20] sm:$0xff]
    %v319 = vld [vmem:[%s3 + $0x28] sm:$0xff]
    %v320 = vld [vmem:[%s3 + $0x30] sm:$0xff]
    %v321 = vld [vmem:[%s3 + $0x38] sm:$0xff]
    %v322 = vld [vmem:[%s3 + $0x40] sm:$0xff]
    %v323 = vld [vmem:[%s3 + $0x48] sm:$0xff]
    %v324 = vld [vmem:[%s3 + $0x50] sm:$0xff]
    %v325 = vld [vmem:[%s3 + $0x58] sm:$0xff]
    %v326 = vld [vmem:[%s3 + $0x60] sm:$0xff]
    %v327 = vld [vmem:[%s3 + $0x68] sm:$0xff]
    %v328 = vld [vmem:[%s3 + $0x70] sm:$0xff]
    %v329 = vld [vmem:[%s3 + $0x78] sm:$0xff]
    %330 = vmatpush.msra.mxu0 %v329
    %331 = vmatpush.msra.mxu0 %v328
    %332 = vmatpush.msra.mxu0 %v327
    %333 = vmatpush.msra.mxu0 %v326
    %334 = vmatpush.msra.mxu0 %v325
    %335 = vmatpush.msra.mxu0 %v324
    %336 = vmatpush.msra.mxu0 %v323
    %337 = vmatpush.msra.mxu0 %v322
    %338 = vmatpush.msra.mxu0 %v321
    %339 = vmatpush.msra.mxu0 %v320
    %340 = vmatpush.msra.mxu0 %v319
    %341 = vmatpush.msra.mxu0 %v318
    %342 = vmatpush.msra.mxu0 %v317
    %343 = vmatpush.msra.mxu0 %v316
    %344 = vmatpush.msra.mxu0 %v315
    %345 = vmatpush.msra.mxu0 %v314
    %346 = vmatmul.f32.gmra.mxu0 %v274
    %v347 = vpop.f32.mrf.mxu0
    %v348 = vadd.f32 0.0, %v347
    %349 = vdwg.mxu0
    %v350 = vperm.slane %v348, 0
    %v351 = vadd.f32 %v309, %v350
    %v352 = vxor.u32 %v351, 2147483648
    %v353 = vmul.f32 %v352, 1.442695
    %v354 = vpow.pop %v353
    %v355 = vadd.f32 %v354, 1.0
    %v356 = vrcp.pop %v355
    %v357 = vmul.f32 %v355, %v356
    %v358 = vsub.f32 1.0, %v357
    %v359 = vmul.f32 %v356, %v358
    %v360 = vadd.f32 %v356, %v359
    %vm361 = vweird.f32 %v355
    %vm362 = vweird.f32 %v356
    %vm363 = vmor %vm361, %vm362
    %v364 = vsel %vm363, %v356, %v360
    %v365 = vand.u32 2147483647, %v355
    %vm366 = vcmp.eq.f32.partialorder %v365, 8.507059e+37
    %v367 = vand.u32 %v355, 2147483648
    %v368 = vor.u32 1.1754944e-38, %v367
    %v369 = vsel %vm366, %v368, %v364
    %v370 = vmul.f32 1.0, %v369
    %371 = vst [vmem:[#allocation2] sm:$0xff] %v370
    %v372 = vperm.slane %v348, 1
    %v373 = vadd.f32 %v312, %v372
    %v374 = vxor.u32 %v373, 2147483648
    %v375 = vmul.f32 %v374, 1.442695
    %v376 = vpow.pop %v375
    %v377 = vadd.f32 %v376, 1.0
    %v378 = vrcp.pop %v377
    %v379 = vmul.f32 %v377, %v378
    %v380 = vsub.f32 1.0, %v379
    %v381 = vmul.f32 %v378, %v380
    %v382 = vadd.f32 %v378, %v381
    %vm383 = vweird.f32 %v377
    %vm384 = vweird.f32 %v378
    %vm385 = vmor %vm383, %vm384
    %v386 = vsel %vm385, %v378, %v382
    %v387 = vand.u32 2147483647, %v377
    %vm388 = vcmp.eq.f32.partialorder %v387, 8.507059e+37
    %v389 = vand.u32 %v377, 2147483648
    %v390 = vor.u32 1.1754944e-38, %v389
    %v391 = vsel %vm388, %v390, %v386
    %v392 = vmul.f32 1.0, %v391
    %393 = vst [vmem:[#allocation2 + $0x8] sm:$0xff] %v392
    // Predicated region
    $region18: #{set_embedding_forward.1} parent=1 // pred_check
      _
    $region19: #{set_embedding_forward.1} parent=1 // pred_check_branch
      %395 = sbr.rel (0) target = $region21
    $region20: #{set_embedding_forward.1} parent=1 // pred_region
      %397 = vsyncadd [#allocation3], 0
      %s398 = sshll.u32 [#allocation2], 4
      %s399 = int_to_ptr.vmem [resolvable:$true] %s398
      %s400 = sshll.u32 %s4, 4
      %s401 = int_to_ptr.hbm [resolvable:$true] %s400
      %406 = dma.vmem_to_hbm [thread:$0]  %s399, 256, %s401, [#allocation3], 128, 128, 8
    $region21: #{set_embedding_forward.1} parent=1 // pred_fallthru
      _
    // Predicated region
    $region22: #{set_embedding_forward.1} parent=1 // pred_check
      _
    $region23: #{set_embedding_forward.1} parent=1 // pred_check_branch
      %408 = sbr.rel (0) target = $region25
    $region24: #{set_embedding_forward.1} parent=1 // pred_region
      %410 = dma.done [#allocation3], 256
    $region25: #{set_embedding_forward.1} parent=1 // pred_fallthru
      _
    %411 = vsyncpa [#allocation3], 1

</llo_original>
